<compile_context>
chip_gen: v6e
topology: v6e:2x2x1
jax: 0.10.0
libtpu: 0.0.40
codegen_flags: <defaults>
</compile_context>

<pallas_src>
import functools

import numpy as np
import jax
import jax.numpy as jnp
from jax.experimental import pallas as pl
from jax.experimental.pallas import tpu as pltpu

# Deterministic, in-script power curve (capacity factor vs wind speed [m/s]),
# shape of a Vestas Offshore V164-8000 curve. Keys are sorted (strictly increasing).
POWER_CURVE_OFFSHORE = {
    0.0: 0.0,
    3.0: 0.0,
    4.0: 0.0125,
    5.0: 0.0563,
    6.0: 0.1287,
    7.0: 0.2237,
    8.0: 0.3412,
    9.0: 0.4850,
    10.0: 0.6425,
    11.0: 0.7838,
    12.0: 0.9000,
    13.0: 0.9750,
    14.0: 1.0,
    25.0: 1.0,
}
assert list(POWER_CURVE_OFFSHORE.keys()) == sorted(POWER_CURVE_OFFSHORE.keys())

_WIND_SPEEDS = tuple(float(k) for k in POWER_CURVE_OFFSHORE.keys())
_POWER_LEVELS = tuple(float(v) for v in POWER_CURVE_OFFSHORE.values())
_N = len(_WIND_SPEEDS)


def _build_knot_coeffs():
    """Compile-time coefficients for the telescoped interpolation.

    For a piecewise-linear curve with y(x_0) = 0 and zero slope on the first
    and last segments (true for this power curve), and ws >= x_0 = 0:

        f(ws) = sum_{j=1..N-2} (s_{j-1} - s_j) * min(ws, x_j)

    where s_k is the slope of segment k.  This reproduces
    torch.searchsorted + gather interpolation (incl. clamping at both ends)
    with only (min, mul, add) per interior knot and zero gathers/selects.
    """
    xs, ys = _WIND_SPEEDS, _POWER_LEVELS
    slopes = [(ys[k + 1] - ys[k]) / (xs[k + 1] - xs[k]) for k in range(_N - 1)]
    assert ys[0] == 0.0, "curve must start at capacity factor 0"
    assert slopes[0] == 0.0, "first segment must be flat (cut-in region)"
    assert slopes[-1] == 0.0, "last segment must be flat (rated region)"
    coeffs = []
    for j in range(1, _N - 1):
        c = slopes[j - 1] - slopes[j]
        if c != 0.0:
            coeffs.append((float(xs[j]), float(c)))
    return tuple(coeffs)


_KNOT_COEFFS = _build_knot_coeffs()


def _power_curve_kernel(u_ref, v_ref, o_ref):
    """wind_speed = sqrt(u^2+v^2); capacity factor via min-ramp-sum interpolation."""
    u = u_ref[...].astype(jnp.float32)
    v = v_ref[...].astype(jnp.float32)
    ws = jnp.sqrt(u * u + v * v)            # EUP slot; ws >= 0 by construction.
    # Initialize accumulator from the first knot term (saves a zeros + add).
    xk0, ck0 = _KNOT_COEFFS[0]
    out = ck0 * jnp.minimum(ws, xk0)
    for xk, ck in _KNOT_COEFFS[1:]:         # 12 knots total -> ~35 VPU ops / element.
        out = out + ck * jnp.minimum(ws, xk)
    o_ref[...] = out.astype(o_ref.dtype)


# ---------------------------------------------------------------------------
# Tiling heuristics
# ---------------------------------------------------------------------------
_LANE_CAP = 2048        # keep any realistic W one contiguous full-width block
_MIN_GRID_STEPS = 8     # >= 2 steps per TensorCore (megacore) + pipeline overlap


def _cdiv(a, b):
    return -(-a // b)


def _block_target_bytes():
    """Per-generation per-block byte target.

    v5e: 2 MiB blocks (HBM-bound there anyway; keeps the double-buffered
    footprint small).  v6e / v7x (and unknown): 4 MiB blocks — 6 buffers x
    4 MiB = 24 MiB, under v6e/v7x scoped defaults and v7x's 64 MiB physical
    per-TC VMEM.  vmem_limit_bytes is set explicitly below regardless, so a
    mis-detected generation is still safe (physical VMEM >= 64 MiB everywhere).
    """
    try:
        kind = jax.devices()[0].device_kind.lower()
    except Exception:  # pragma: no cover - defensive
        kind = ""
    if "v5e" in kind or "v5 lite" in kind or "v5lite" in kind:
        return 2 << 20
    return 4 << 20


def _spatial_block(B, H, W, target_bytes):
    """Pick (th, tw): lane-dense, sublane-aligned, VMEM-bounded, megacore-aware."""
    # Lane dim: full W (contiguous row DMAs, unmasked vst) or multiples of 128.
    tw = W if W <= _LANE_CAP else _LANE_CAP
    w_blocks = _cdiv(W, tw)

    # Sublane rows per block bounded by the per-block byte target.
    max_th = max(8, (target_bytes // 4) // max(tw, 1))
    if H <= max_th:
        th = H                                   # full H (always legal)
    else:
        th = max(8, (max_th // 8) * 8)           # multiple of 8
    h_blocks = _cdiv(H, th)

    # Megacore / pipelining guarantee: never let the parallel grid collapse to
    # too few steps (esp. B=1) — both TensorCores need tiles and the
    # double-buffer pipeline needs something to overlap.
    if B * h_blocks * w_blocks < _MIN_GRID_STEPS and H > 8:
        need_h = min(_cdiv(_MIN_GRID_STEPS, B * w_blocks), _cdiv(H, 8))
        if need_h > h_blocks:
            th = max(8, ((_cdiv(H, need_h) + 7) // 8) * 8)   # multiple of 8
    return th, tw


# ---------------------------------------------------------------------------
# Forward
# ---------------------------------------------------------------------------
@functools.partial(jax.jit, static_argnames=("use_surface", "z", "out_dtype"))
def baseline_formula_forward(pangu_output_upper, pangu_output_surface,
                             use_surface=False, z=0, out_dtype=jnp.float32):
    """Pallas port of BaselineFormula.forward.

    out_dtype=jnp.bfloat16 halves HBM writeback (useful on HBM-bound v5e) at
    ~1e-3 absolute output error; default float32 matches torch semantics.
    bf16 u/v inputs are accepted transparently (kernel computes in f32).
    """
    target_bytes = _block_target_bytes()

    if use_surface:
        B, _, H, W = pangu_output_surface.shape
        src = pangu_output_surface
        th, tw = _spatial_block(B, H, W, target_bytes)
        # Slice channels 1 (u10) and 2 (v10) via BlockSpec index maps.
        u_spec = pl.BlockSpec((1, pl.Squeezed(), th, tw),
                              lambda b, hi, wi: (b, 1, hi, wi))
        v_spec = pl.BlockSpec((1, pl.Squeezed(), th, tw),
                              lambda b, hi, wi: (b, 2, hi, wi))
    else:
        B, _, _, H, W = pangu_output_upper.shape
        src = pangu_output_upper
        th, tw = _spatial_block(B, H, W, target_bytes)
        # Slice channels 3 (u) / 4 (v) at pressure level z via BlockSpec index maps.
        u_spec = pl.BlockSpec((1, pl.Squeezed(), pl.Squeezed(), th, tw),
                              lambda b, hi, wi: (b, 3, z, hi, wi))
        v_spec = pl.BlockSpec((1, pl.Squeezed(), pl.Squeezed(), th, tw),
                              lambda b, hi, wi: (b, 4, z, hi, wi))

    out_spec = pl.BlockSpec((1, th, tw), lambda b, hi, wi: (b, hi, wi))
    grid = (B, _cdiv(H, th), _cdiv(W, tw))

    in_itemsize = np.dtype(src.dtype).itemsize
    out_itemsize = np.dtype(out_dtype).itemsize

    # Explicit scoped-VMEM budget from the actual double-buffered footprint
    # (2 inputs + 1 output, 2 buffers each) plus margin; stays under every
    # generation's physical VMEM (>= 64 MiB per TC).
    tile_in_bytes = th * tw * in_itemsize
    tile_out_bytes = th * tw * out_itemsize
    vmem_limit = int(min(max(2 * (2 * tile_in_bytes + tile_out_bytes) + (8 << 20),
                             16 << 20),
                         48 << 20))

    n_elem = B * H * W
    cost = pl.CostEstimate(
        flops=int((3 + 3 * len(_KNOT_COEFFS)) * n_elem),
        transcendentals=int(n_elem),
        bytes_accessed=int((2 * in_itemsize + out_itemsize) * n_elem),
    )

    return pl.pallas_call(
        _power_curve_kernel,
        out_shape=jax.ShapeDtypeStruct((B, H, W), out_dtype),
        grid_spec=pltpu.PrefetchScalarGridSpec(
            num_scalar_prefetch=0,
            grid=grid,
            in_specs=[u_spec, v_spec],
            out_specs=out_spec,
        ),
        compiler_params=pltpu.CompilerParams(
            dimension_semantics=("parallel", "parallel", "parallel"),
            vmem_limit_bytes=vmem_limit),
        cost_estimate=cost,
    )(src, src)


def _reference(pangu_output_upper, pangu_output_surface, use_surface=False, z=0):
    """Pure-JAX reference mirroring the PyTorch forward."""
    if use_surface:
        u = pangu_output_surface[:, 1, :, :]
        v = pangu_output_surface[:, 2, :, :]
    else:
        u = pangu_output_upper[:, 3, z, :, :]
        v = pangu_output_upper[:, 4, z, :, :]
    ws = jnp.sqrt(u.astype(jnp.float32) ** 2 + v.astype(jnp.float32) ** 2)
    xp = jnp.asarray(_WIND_SPEEDS, jnp.float32)
    fp = jnp.asarray(_POWER_LEVELS, jnp.float32)
    ws = jnp.clip(ws, xp[0], xp[-1])
    return jnp.interp(ws, xp, fp)


if __name__ == "__main__":
    key = jax.random.PRNGKey(0)
    k_up, k_sf, k_odd = jax.random.split(key, 3)

    B, C_UP, Z, C_SF, H, W = 2, 5, 2, 4, 16, 128
    # Scale so wind speeds span the interesting part of the power curve.
    pangu_upper = 10.0 * jax.random.normal(k_up, (B, C_UP, Z, H, W), jnp.float32)
    pangu_surface = 10.0 * jax.random.normal(k_sf, (B, C_SF, H, W), jnp.float32)

    # Upper-level path (default: use_surface=False, z=0)
    out_upper = jax.block_until_ready(
        baseline_formula_forward(pangu_upper, pangu_surface, use_surface=False, z=0))
    ref_upper = _reference(pangu_upper, pangu_surface, use_surface=False, z=0)
    assert out_upper.shape == (B, H, W)
    assert jnp.allclose(out_upper, ref_upper, atol=1e-5, rtol=1e-5)

    # Surface path
    out_surface = jax.block_until_ready(
        baseline_formula_forward(pangu_upper, pangu_surface, use_surface=True))
    ref_surface = _reference(pangu_upper, pangu_surface, use_surface=True)
    assert out_surface.shape == (B, H, W)
    assert jnp.allclose(out_surface, ref_surface, atol=1e-5, rtol=1e-5)

    # Non-(8,128)-aligned spatial shape (exercises partial edge blocks + masked lanes).
    Ho, Wo = 12, 160
    pangu_upper_odd = 10.0 * jax.random.normal(
        k_odd, (B, C_UP, Z, Ho, Wo), jnp.float32)
    out_odd = jax.block_until_ready(
        baseline_formula_forward(pangu_upper_odd, pangu_surface,
                                 use_surface=False, z=1))
    ref_odd = _reference(pangu_upper_odd, pangu_surface, use_surface=False, z=1)
    assert out_odd.shape == (B, Ho, Wo)
    assert jnp.allclose(out_odd, ref_odd, atol=1e-5, rtol=1e-5)

    # Optional bf16-output path (HBM-writeback saver for v5e); relaxed tolerance.
    out_bf16 = jax.block_until_ready(
        baseline_formula_forward(pangu_upper, pangu_surface, use_surface=False,
                                 z=0, out_dtype=jnp.bfloat16))
    assert out_bf16.dtype == jnp.bfloat16
    assert jnp.allclose(out_bf16.astype(jnp.float32), ref_upper, atol=4e-3)

    print("KERNEL_OK")
</pallas_src>

<mosaic_0001>
module attributes {stable_mosaic.version = 11 : i64} {
  func.func @_power_curve_kernel(%arg0: i32, %arg1: i32, %arg2: i32, %arg3: memref<1x1x1x8x128xf32, #tpu.memory_space<vmem>>, %arg4: memref<1x1x1x8x128xf32, #tpu.memory_space<vmem>>, %arg5: memref<1x8x128xf32, #tpu.memory_space<vmem>>) attributes {dimension_semantics = [#tpu.dimension_semantics<parallel>, #tpu.dimension_semantics<parallel>, #tpu.dimension_semantics<parallel>], iteration_bounds = array<i64: 2, 2, 1>, scalar_prefetch = 0 : i64, scratch_operands = 0 : i64, tpu.core_type = #tpu.core_type<tc>, window_params = [{transform_indices = @transform_0, window_bounds = array<i64: 1, 1, 1, 8, 128>}, {transform_indices = @transform_1, window_bounds = array<i64: 1, 1, 1, 8, 128>}, {transform_indices = @transform_2, window_bounds = array<i64: 1, 8, 128>}]} {
    %c0 = arith.constant 0 : index
    %c0_0 = arith.constant 0 : index
    %c0_1 = arith.constant 0 : index
    %c0_2 = arith.constant 0 : index
    %c0_3 = arith.constant 0 : index
    %0 = vector.load %arg3[%c0, %c0_0, %c0_1, %c0_2, %c0_3] : memref<1x1x1x8x128xf32, #tpu.memory_space<vmem>>, vector<1x1x1x8x128xf32>
    %1 = vector.shape_cast %0 : vector<1x1x1x8x128xf32> to vector<1x8x128xf32>
    %c0_4 = arith.constant 0 : index
    %c0_5 = arith.constant 0 : index
    %c0_6 = arith.constant 0 : index
    %c0_7 = arith.constant 0 : index
    %c0_8 = arith.constant 0 : index
    %2 = vector.load %arg4[%c0_4, %c0_5, %c0_6, %c0_7, %c0_8] : memref<1x1x1x8x128xf32, #tpu.memory_space<vmem>>, vector<1x1x1x8x128xf32>
    %3 = vector.shape_cast %2 : vector<1x1x1x8x128xf32> to vector<1x8x128xf32>
    %4 = arith.mulf %1, %1 : vector<1x8x128xf32>
    %5 = arith.mulf %3, %3 : vector<1x8x128xf32>
    %6 = arith.addf %4, %5 : vector<1x8x128xf32>
    %7 = math.sqrt %6 : vector<1x8x128xf32>
    %cst = arith.constant 3.000000e+00 : f32
    %8 = vector.broadcast %cst : f32 to vector<1x8x128xf32>
    %9 = arith.minimumf %7, %8 : vector<1x8x128xf32>
    %cst_9 = arith.constant -1.250000e-02 : f32
    %10 = vector.broadcast %cst_9 : f32 to vector<1x8x128xf32>
    %11 = arith.mulf %10, %9 : vector<1x8x128xf32>
    %cst_10 = arith.constant 4.000000e+00 : f32
    %12 = vector.broadcast %cst_10 : f32 to vector<1x8x128xf32>
    %13 = arith.minimumf %7, %12 : vector<1x8x128xf32>
    %cst_11 = arith.constant -3.130000e-02 : f32
    %14 = vector.broadcast %cst_11 : f32 to vector<1x8x128xf32>
    %15 = arith.mulf %14, %13 : vector<1x8x128xf32>
    %16 = arith.addf %11, %15 : vector<1x8x128xf32>
    %cst_12 = arith.constant 5.000000e+00 : f32
    %17 = vector.broadcast %cst_12 : f32 to vector<1x8x128xf32>
    %18 = arith.minimumf %7, %17 : vector<1x8x128xf32>
    %cst_13 = arith.constant -2.860000e-02 : f32
    %19 = vector.broadcast %cst_13 : f32 to vector<1x8x128xf32>
    %20 = arith.mulf %19, %18 : vector<1x8x128xf32>
    %21 = arith.addf %16, %20 : vector<1x8x128xf32>
    %cst_14 = arith.constant 6.000000e+00 : f32
    %22 = vector.broadcast %cst_14 : f32 to vector<1x8x128xf32>
    %23 = arith.minimumf %7, %22 : vector<1x8x128xf32>
    %cst_15 = arith.constant -2.260000e-02 : f32
    %24 = vector.broadcast %cst_15 : f32 to vector<1x8x128xf32>
    %25 = arith.mulf %24, %23 : vector<1x8x128xf32>
    %26 = arith.addf %21, %25 : vector<1x8x128xf32>
    %cst_16 = arith.constant 7.000000e+00 : f32
    %27 = vector.broadcast %cst_16 : f32 to vector<1x8x128xf32>
    %28 = arith.minimumf %7, %27 : vector<1x8x128xf32>
    %cst_17 = arith.constant -2.250000e-02 : f32
    %29 = vector.broadcast %cst_17 : f32 to vector<1x8x128xf32>
    %30 = arith.mulf %29, %28 : vector<1x8x128xf32>
    %31 = arith.addf %26, %30 : vector<1x8x128xf32>
    %cst_18 = arith.constant 8.000000e+00 : f32
    %32 = vector.broadcast %cst_18 : f32 to vector<1x8x128xf32>
    %33 = arith.minimumf %7, %32 : vector<1x8x128xf32>
    %cst_19 = arith.constant -2.630000e-02 : f32
    %34 = vector.broadcast %cst_19 : f32 to vector<1x8x128xf32>
    %35 = arith.mulf %34, %33 : vector<1x8x128xf32>
    %36 = arith.addf %31, %35 : vector<1x8x128xf32>
    %cst_20 = arith.constant 9.000000e+00 : f32
    %37 = vector.broadcast %cst_20 : f32 to vector<1x8x128xf32>
    %38 = arith.minimumf %7, %37 : vector<1x8x128xf32>
    %cst_21 = arith.constant -1.370000e-02 : f32
    %39 = vector.broadcast %cst_21 : f32 to vector<1x8x128xf32>
    %40 = arith.mulf %39, %38 : vector<1x8x128xf32>
    %41 = arith.addf %36, %40 : vector<1x8x128xf32>
    %cst_22 = arith.constant 1.000000e+01 : f32
    %42 = vector.broadcast %cst_22 : f32 to vector<1x8x128xf32>
    %43 = arith.minimumf %7, %42 : vector<1x8x128xf32>
    %cst_23 = arith.constant 1.620000e-02 : f32
    %44 = vector.broadcast %cst_23 : f32 to vector<1x8x128xf32>
    %45 = arith.mulf %44, %43 : vector<1x8x128xf32>
    %46 = arith.addf %41, %45 : vector<1x8x128xf32>
    %cst_24 = arith.constant 1.100000e+01 : f32
    %47 = vector.broadcast %cst_24 : f32 to vector<1x8x128xf32>
    %48 = arith.minimumf %7, %47 : vector<1x8x128xf32>
    %cst_25 = arith.constant 2.510000e-02 : f32
    %49 = vector.broadcast %cst_25 : f32 to vector<1x8x128xf32>
    %50 = arith.mulf %49, %48 : vector<1x8x128xf32>
    %51 = arith.addf %46, %50 : vector<1x8x128xf32>
    %cst_26 = arith.constant 1.200000e+01 : f32
    %52 = vector.broadcast %cst_26 : f32 to vector<1x8x128xf32>
    %53 = arith.minimumf %7, %52 : vector<1x8x128xf32>
    %cst_27 = arith.constant 4.120000e-02 : f32
    %54 = vector.broadcast %cst_27 : f32 to vector<1x8x128xf32>
    %55 = arith.mulf %54, %53 : vector<1x8x128xf32>
    %56 = arith.addf %51, %55 : vector<1x8x128xf32>
    %cst_28 = arith.constant 1.300000e+01 : f32
    %57 = vector.broadcast %cst_28 : f32 to vector<1x8x128xf32>
    %58 = arith.minimumf %7, %57 : vector<1x8x128xf32>
    %cst_29 = arith.constant 5.000000e-02 : f32
    %59 = vector.broadcast %cst_29 : f32 to vector<1x8x128xf32>
    %60 = arith.mulf %59, %58 : vector<1x8x128xf32>
    %61 = arith.addf %56, %60 : vector<1x8x128xf32>
    %cst_30 = arith.constant 1.400000e+01 : f32
    %62 = vector.broadcast %cst_30 : f32 to vector<1x8x128xf32>
    %63 = arith.minimumf %7, %62 : vector<1x8x128xf32>
    %cst_31 = arith.constant 2.500000e-02 : f32
    %64 = vector.broadcast %cst_31 : f32 to vector<1x8x128xf32>
    %65 = arith.mulf %64, %63 : vector<1x8x128xf32>
    %66 = arith.addf %61, %65 : vector<1x8x128xf32>
    %c0_32 = arith.constant 0 : index
    %c0_33 = arith.constant 0 : index
    %c0_34 = arith.constant 0 : index
    %67 = vector.load %arg5[%c0_32, %c0_33, %c0_34] : memref<1x8x128xf32, #tpu.memory_space<vmem>>, vector<1x8x128xf32>
    tpu.vector_store %arg5[%c0_32, %c0_33, %c0_34], %66 {strides = array<i32>} : memref<1x8x128xf32, #tpu.memory_space<vmem>>, vector<1x8x128xf32>,
    return
  }
  func.func @transform_0(%arg0: i32, %arg1: i32, %arg2: i32) -> (i32, i32, i32, i32, i32) {
    %c3_i32 = arith.constant 3 : i32
    %c0_i32 = arith.constant 0 : i32
    %c0_i32_0 = arith.constant 0 : i32
    return %arg0, %c3_i32, %c0_i32, %arg1, %arg2 : i32, i32, i32, i32, i32
  }
  func.func @transform_1(%arg0: i32, %arg1: i32, %arg2: i32) -> (i32, i32, i32, i32, i32) {
    %c4_i32 = arith.constant 4 : i32
    %c0_i32 = arith.constant 0 : i32
    %c0_i32_0 = arith.constant 0 : i32
    return %arg0, %c4_i32, %c0_i32, %arg1, %arg2 : i32, i32, i32, i32, i32
  }
  func.func @transform_2(%arg0: i32, %arg1: i32, %arg2: i32) -> (i32, i32, i32) {
    %c0_i32 = arith.constant 0 : i32
    return %arg0, %arg1, %arg2 : i32, i32, i32
  }
}

</mosaic_0001>

<llo_original>
// kernel: baseline_formula_forward.1
$region0: #{baseline_formula_forward.1}
  #allocation0 [shape = 'u32[]', space=smem, size = 0x4, offset = 0x4, fixed_abs, tag = 'smem constant byte address 0x4 - core index']
  #allocation1 [shape = 'u32[144,128]{1,0:T(1,128)}', space=vmem, size = 0x12000, scoped, tag = 'internal scratch']
  %s0 = inlined_call_operand.hbm [shape: f32[2,5,2,16,128], index: 0, kind: input, shape index: {}, may-alias: {0,1}]
  %s1 = inlined_call_operand.hbm [shape: f32[2,5,2,16,128], index: 1, kind: input, shape index: {}, may-alias: {0,1}]
  %s2 = inlined_call_operand.hbm [shape: f32[2,16,128], index: 2, kind: output, shape index: {}]
  %s3 = sld [smem:[#allocation0]]
  $region49: #{baseline_formula_forward.1} parent=0
    _
  %s5 = ssub.s32 1, %s3
  %s6 = scalar_select 0, %s5, %s3
  $region1: #{baseline_formula_forward.1} parent=0
    #allocation2 [shape = 'u8[8192]{0}', space=vmem, size = 0x2000, scoped, tag = 'input window, operand 0']
    #allocation3 [shape = 's32[2]{0}', space=sflag, size = 0x8, scoped, tag = 'scoped memory for baseline_formula_forward.1']
    #allocation4 [shape = 's32[2]{0}', space=sflag, size = 0x8, scoped, tag = 'scoped memory for baseline_formula_forward.1']
    #allocation5 [shape = 'u8[8192]{0}', space=vmem, size = 0x2000, scoped, tag = 'input window, operand 1']
    #allocation6 [shape = 's32[2]{0}', space=sflag, size = 0x8, scoped, tag = 'scoped memory for baseline_formula_forward.1']
    #allocation7 [shape = 'u8[8192]{0}', space=vmem, size = 0x2000, scoped, tag = 'output window, operand 0']
    %7 = vsyncpa [#allocation3], 0
    %s8 = scalar_lea.sflag [#allocation3], 1
    %9 = vsyncpa %s8, 0
    %10 = vsyncpa [#allocation6], 0
    %s11 = scalar_lea.sflag [#allocation6], 1
    %12 = vsyncpa %s11, 0
    %13 = vsyncpa [#allocation4], 0
    %s14 = scalar_lea.sflag [#allocation4], 1
    %15 = vsyncpa %s14, 0
    loop: start=0, step=1, limit=6
    $region2: #{baseline_formula_forward.1} parent=1 // loop_pre_header
      _
    $region3: #{baseline_formula_forward.1} parent=1 // loop_header
      %s17 = sphi 0, %s21
      %p18 = scmp.ge.s32.totalorder %s17, 6
      %s24 = sphi 0, %s43
      %s25 = sphi 0, %s39
      %s26 = sphi 0, %s35
      %s27 = sphi 0, %s24
      %s28 = sphi 0, %s25
      %s29 = sphi 0, %s26
      %s30 = sphi 0, %s27
      %s31 = sphi 0, %s28
      %s32 = sphi 0, %s29
      %s50 = sphi 0, %s52
      %s53 = sphi 0, %s50
      %s54 = sphi 0, %s53
      %s70 = sphi 0, %s54
      %s80 = sphi 0, %s82
      %s83 = sphi 0, %s80
      %s84 = sphi 0, %s83
      %s100 = sphi 0, %s84
      %s110 = sphi 0, %s112
      %s113 = sphi 0, %s110
      %s114 = sphi 0, %s113
      %s130 = sphi 0, %s114
    $region4: #{baseline_formula_forward.1} parent=1 // loop_header_branch
      %20 = sbr.rel (%p18) target = $region8
    $region5: #{baseline_formula_forward.1} parent=1 // loop_body
      %s22 = ssub.s32 %s17, 1
      %s23 = ssub.s32 %s17, 2
      %s33 = sadd.s32 1, %s26
      %p34 = scmp.ge.s32.totalorder %s33, 1
      %s35 = scalar_select %p34, 0, %s33
      %s36 = sadd.s32 1, %s25
      %s37 = scalar_select %p34, %s36, %s25
      %p38 = scmp.ge.s32.totalorder %s37, 2
      %s39 = scalar_select %p38, 0, %s37
      %s40 = sadd.s32 1, %s24
      %s41 = scalar_select %p38, %s40, %s24
      %p42 = scmp.ge.s32.totalorder %s41, 2
      %s43 = scalar_select %p42, 0, %s41
      %s44 = ssub.s32 %s24, %s43
      %s45 = ssub.s32 %s25, %s39
      %s46 = sor.u32 %s44, %s45
      %s47 = ssub.s32 %s26, %s35
      %s48 = sor.u32 %s46, %s47
      %p49 = scmp.eq.s32.totalorder %s48, 0
      %s51 = sadd.s32 %s50, 1
      %s52 = scalar_select %p49, %s50, %s51
      %p55 = pneg %p49
      %p56 = scmp.eq.s32.totalorder %s17, 3
      %p57 = por %p55, %p56
      %p58 = scmp.ne.s32.totalorder %s50, %s53
      %p59 = scmp.eq.s32.totalorder %s17, 0
      %p60 = por %p58, %p59
      %p61 = scmp.ne.s32.totalorder %s50, %s53
      %p62 = scmp.eq.s32.totalorder %s22, 3
      %p63 = por %p61, %p62
      %p64 = scmp.ne.s32.totalorder %s53, %s54
      %p65 = scmp.eq.s32.totalorder %s22, 0
      %p66 = por %p64, %p65
      %p67 = scmp.ne.s32.totalorder %s53, %s54
      %p68 = scmp.eq.s32.totalorder %s23, 3
      %p69 = por %p67, %p68
      %p71 = scmp.ne.s32.totalorder %s54, %s70
      %p72 = scmp.eq.s32.totalorder %s23, 0
      %p73 = por %p71, %p72
      %s74 = ssub.s32 %s24, %s43
      %s75 = ssub.s32 %s25, %s39
      %s76 = sor.u32 %s74, %s75
      %s77 = ssub.s32 %s26, %s35
      %s78 = sor.u32 %s76, %s77
      %p79 = scmp.eq.s32.totalorder %s78, 0
      %s81 = sadd.s32 %s80, 1
      %s82 = scalar_select %p79, %s80, %s81
      %p85 = pneg %p79
      %p86 = scmp.eq.s32.totalorder %s17, 3
      %p87 = por %p85, %p86
      %p88 = scmp.ne.s32.totalorder %s80, %s83
      %p89 = scmp.eq.s32.totalorder %s17, 0
      %p90 = por %p88, %p89
      %p91 = scmp.ne.s32.totalorder %s80, %s83
      %p92 = scmp.eq.s32.totalorder %s22, 3
      %p93 = por %p91, %p92
      %p94 = scmp.ne.s32.totalorder %s83, %s84
      %p95 = scmp.eq.s32.totalorder %s22, 0
      %p96 = por %p94, %p95
      %p97 = scmp.ne.s32.totalorder %s83, %s84
      %p98 = scmp.eq.s32.totalorder %s23, 3
      %p99 = por %p97, %p98
      %p101 = scmp.ne.s32.totalorder %s84, %s100
      %p102 = scmp.eq.s32.totalorder %s23, 0
      %p103 = por %p101, %p102
      %s104 = ssub.s32 %s24, %s43
      %s105 = ssub.s32 %s25, %s39
      %s106 = sor.u32 %s104, %s105
      %s107 = ssub.s32 %s26, %s35
      %s108 = sor.u32 %s106, %s107
      %p109 = scmp.eq.s32.totalorder %s108, 0
      %s111 = sadd.s32 %s110, 1
      %s112 = scalar_select %p109, %s110, %s111
      %p115 = pneg %p109
      %p116 = scmp.eq.s32.totalorder %s17, 3
      %p117 = por %p115, %p116
      %p118 = scmp.ne.s32.totalorder %s110, %s113
      %p119 = scmp.eq.s32.totalorder %s17, 0
      %p120 = por %p118, %p119
      %p121 = scmp.ne.s32.totalorder %s110, %s113
      %p122 = scmp.eq.s32.totalorder %s22, 3
      %p123 = por %p121, %p122
      %p124 = scmp.ne.s32.totalorder %s113, %s114
      %p125 = scmp.eq.s32.totalorder %s22, 0
      %p126 = por %p124, %p125
      %p127 = scmp.ne.s32.totalorder %s113, %s114
      %p128 = scmp.eq.s32.totalorder %s23, 3
      %p129 = por %p127, %p128
      %p131 = scmp.ne.s32.totalorder %s114, %s130
      %p132 = scmp.eq.s32.totalorder %s23, 0
      %p133 = por %p131, %p132
      %p134 = scmp.le.s32.totalorder 1, %s17
      %p135 = scmp.lt.s32.totalorder %s17, 5
      %p136 = pnand %p134, %p135
      %p137 = pneg %p136
      // Predicated region
      $region9: #{baseline_formula_forward.1} parent=5 // pred_check
        _
      $region10: #{baseline_formula_forward.1} parent=5 // pred_check_branch
        %139 = sbr.rel (%p136) target = $region12
      $region11: #{baseline_formula_forward.1} parent=5 // pred_region
        %s140 = ssub.s32 %s17, 1
      $region12: #{baseline_formula_forward.1} parent=5 // pred_fallthru
        _
      %p141 = scmp.lt.s32.totalorder %s17, 4
      // Predicated region
      $region13: #{baseline_formula_forward.1} parent=5 // pred_check
        %p142 = pneg %p141
      $region14: #{baseline_formula_forward.1} parent=5 // pred_check_branch
        %144 = sbr.rel (%p142) target = $region16
      $region15: #{baseline_formula_forward.1} parent=5 // pred_region
        // Predicated region
        $region17: #{baseline_formula_forward.1} parent=15 // pred_check
          %p145 = pneg %p60
        $region18: #{baseline_formula_forward.1} parent=15 // pred_check_branch
          %147 = sbr.rel (%p145) target = $region20
        $region19: #{baseline_formula_forward.1} parent=15 // pred_region
          %s148 = sand.u32 %s50, 1
          %s149 = scalar_lea.sflag [#allocation3], %s148
          %s150 = sand.u32 %s50, 1
          %s151 = smul.addr %s150, 8
          %s152 = scalar_lea.vmem [#allocation2], %s151
          %s154 = ssub.s32 128, 128
          %155 = vsyncadd %s149, %s154
          %s156 = sadd.s32 %s26, %s25
          %s157 = sadd.s32 %s156, 12
          %s158 = smul.addr %s24, 20
          %s159 = sadd.s32 %s157, %s158
          %s160 = smul.addr %s159, 128
          %s161 = scalar_lea.hbm %s0, %s160
          %s163 = sshll.u32 %s152, 4
          %s164 = int_to_ptr.vmem [resolvable:$true] %s163
          %166 = dma.hbm_to_vmem [thread:$0]  %s161, 128, %s164, %s149
        $region20: #{baseline_formula_forward.1} parent=15 // pred_fallthru
          _
        // Predicated region
        $region21: #{baseline_formula_forward.1} parent=15 // pred_check
          %p167 = pneg %p90
        $region22: #{baseline_formula_forward.1} parent=15 // pred_check_branch
          %169 = sbr.rel (%p167) target = $region24
        $region23: #{baseline_formula_forward.1} parent=15 // pred_region
          %s170 = sand.u32 %s80, 1
          %s171 = scalar_lea.sflag [#allocation6], %s170
          %s172 = sand.u32 %s80, 1
          %s173 = smul.addr %s172, 8
          %s174 = scalar_lea.vmem [#allocation5], %s173
          %s176 = ssub.s32 128, 128
          %177 = vsyncadd %s171, %s176
          %s178 = sadd.s32 %s26, %s25
          %s179 = sadd.s32 %s178, 16
          %s180 = smul.addr %s24, 20
          %s181 = sadd.s32 %s179, %s180
          %s182 = smul.addr %s181, 128
          %s183 = scalar_lea.hbm %s1, %s182
          %s185 = sshll.u32 %s174, 4
          %s186 = int_to_ptr.vmem [resolvable:$true] %s185
          %188 = dma.hbm_to_vmem [thread:$0]  %s183, 128, %s186, %s171
        $region24: #{baseline_formula_forward.1} parent=15 // pred_fallthru
          _
      $region16: #{baseline_formula_forward.1} parent=5 // pred_fallthru
        _
      %p189 = scmp.le.s32.totalorder 1, %s17
      %p190 = scmp.lt.s32.totalorder %s17, 5
      %p191 = pnand %p189, %p190
      %p192 = pneg %p191
      // Predicated region
      $region25: #{baseline_formula_forward.1} parent=5 // pred_check
        _
      $region26: #{baseline_formula_forward.1} parent=5 // pred_check_branch
        %194 = sbr.rel (%p191) target = $region28
      $region27: #{baseline_formula_forward.1} parent=5 // pred_region
        %s195 = ssub.s32 %s17, 1
        %s196 = sand.u32 %s53, 1
        %s197 = scalar_lea.sflag [#allocation3], %s196
        %s198 = sand.u32 %s53, 1
        %s199 = smul.addr %s198, 8
        %s200 = scalar_lea.vmem [#allocation2], %s199
        // Predicated region
        $region29: #{baseline_formula_forward.1} parent=27 // pred_check
          %p201 = pneg %p66
        $region30: #{baseline_formula_forward.1} parent=27 // pred_check_branch
          %203 = sbr.rel (%p201) target = $region32
        $region31: #{baseline_formula_forward.1} parent=27 // pred_region
          %204 = dma.done %s197, 128
        $region32: #{baseline_formula_forward.1} parent=27 // pred_fallthru
          _
        %s205 = sand.u32 %s83, 1
        %s206 = scalar_lea.sflag [#allocation6], %s205
        %s207 = sand.u32 %s83, 1
        %s208 = smul.addr %s207, 8
        %s209 = scalar_lea.vmem [#allocation5], %s208
        // Predicated region
        $region33: #{baseline_formula_forward.1} parent=27 // pred_check
          %p210 = pneg %p96
        $region34: #{baseline_formula_forward.1} parent=27 // pred_check_branch
          %212 = sbr.rel (%p210) target = $region36
        $region35: #{baseline_formula_forward.1} parent=27 // pred_region
          %213 = dma.done %s206, 128
        $region36: #{baseline_formula_forward.1} parent=27 // pred_fallthru
          _
        %s214 = sand.u32 %s53, 1
        %s215 = scalar_lea.sflag [#allocation3], %s214
        %s216 = sand.u32 %s53, 1
        %s217 = smul.addr %s216, 8
        %s218 = scalar_lea.vmem [#allocation2], %s217
        %p219 = pneg %p66
        %p220 = pneg %p63
        %s221 = sand.u32 %s83, 1
        %s222 = scalar_lea.sflag [#allocation6], %s221
        %s223 = sand.u32 %s83, 1
        %s224 = smul.addr %s223, 8
        %s225 = scalar_lea.vmem [#allocation5], %s224
        %p226 = pneg %p96
        %p227 = pneg %p93
        %p228 = pneg %p126
        %p229 = pneg %p123
        %s230 = sand.u32 %s113, 1
        %s231 = scalar_lea.sflag [#allocation4], %s230
        %s232 = sand.u32 %s113, 1
        %s233 = smul.addr %s232, 8
        %s234 = scalar_lea.vmem [#allocation7], %s233
        %v235 = vld [vmem:[%s200] sm:$0xff]
        %v236 = vld [vmem:[%s209] sm:$0xff]
        %v237 = vmul.f32 %v235, %v235
        %v238 = vmul.f32 %v236, %v236
        %v239 = vadd.f32 %v237, %v238
        %v240 = vrsqrt.pop %v239
        %v241 = vmul.f32 %v239, %v240
        %vm242 = vcmp.eq.f32.partialorder %v239, inf
        %v243 = vsel %vm242, %v239, %v241
        %vm244 = vcmp.eq.f32.partialorder %v239, 0.0
        %v245 = vand.u32 %v239, 2147483648
        %v246 = vsel %vm244, %v245, %v243
        %v247 = vmin.f32 %v246, 3.0
        %v248 = vmul.f32 %v247, -0.0125
        %v249 = vmin.f32 %v246, 4.0
        %v250 = vmul.f32 %v249, -0.0313
        %v251 = vadd.f32 %v248, %v250
        %v252 = vmin.f32 %v246, 5.0
        %v253 = vmul.f32 %v252, -0.0286
        %v254 = vadd.f32 %v251, %v253
        %v255 = vmin.f32 %v246, 6.0
        %v256 = vmul.f32 %v255, -0.0226
        %v257 = vadd.f32 %v254, %v256
        %v258 = vmin.f32 %v246, 7.0
        %v259 = vmul.f32 %v258, -0.0225
        %v260 = vadd.f32 %v257, %v259
        %v261 = vmin.f32 %v246, 8.0
        %v262 = vmul.f32 %v261, -0.0263
        %v263 = vadd.f32 %v260, %v262
        %v264 = vmin.f32 %v246, 9.0
        %v265 = vmul.f32 %v264, -0.0137
        %v266 = vadd.f32 %v263, %v265
        %v267 = vmin.f32 %v246, 10.0
        %v268 = vmul.f32 %v267, 0.0162
        %v269 = vadd.f32 %v266, %v268
        %v270 = vmin.f32 %v246, 11.0
        %v271 = vmul.f32 %v270, 0.0251
        %v272 = vadd.f32 %v269, %v271
        %v273 = vmin.f32 %v246, 12.0
        %v274 = vmul.f32 %v273, 0.0412
        %v275 = vadd.f32 %v272, %v274
        %v276 = vmin.f32 %v246, 13.0
        %v277 = vmul.f32 %v276, 0.05
        %v278 = vadd.f32 %v275, %v277
        %v279 = vmin.f32 %v246, 14.0
        %v280 = vmul.f32 %v279, 0.025
        %v281 = vadd.f32 %v278, %v280
        %282 = vst [vmem:[%s234] sm:$0xff] %v281
        %s283 = sand.u32 %s113, 1
        %s284 = scalar_lea.sflag [#allocation4], %s283
        %s285 = sand.u32 %s113, 1
        %s286 = smul.addr %s285, 8
        %s287 = scalar_lea.vmem [#allocation7], %s286
        // Predicated region
        $region37: #{baseline_formula_forward.1} parent=27 // pred_check
          %p288 = pneg %p123
        $region38: #{baseline_formula_forward.1} parent=27 // pred_check_branch
          %290 = sbr.rel (%p288) target = $region40
        $region39: #{baseline_formula_forward.1} parent=27 // pred_region
          %s292 = ssub.s32 128, 128
          %293 = vsyncadd %s284, %s292
          %s294 = sadd.s32 %s29, %s28
          %s295 = smul.addr %s27, 2
          %s296 = sadd.s32 %s294, %s295
          %s297 = smul.addr %s296, 128
          %s298 = scalar_lea.hbm %s2, %s297
          %s300 = sshll.u32 %s287, 4
          %s301 = int_to_ptr.vmem [resolvable:$true] %s300
          %303 = dma.vmem_to_hbm [thread:$0]  %s301, 128, %s298, %s284
        $region40: #{baseline_formula_forward.1} parent=27 // pred_fallthru
          _
      $region28: #{baseline_formula_forward.1} parent=5 // pred_fallthru
        _
      %p304 = scmp.le.s32.totalorder 2, %s17
      // Predicated region
      $region41: #{baseline_formula_forward.1} parent=5 // pred_check
        %p305 = pneg %p304
      $region42: #{baseline_formula_forward.1} parent=5 // pred_check_branch
        %307 = sbr.rel (%p305) target = $region44
      $region43: #{baseline_formula_forward.1} parent=5 // pred_region
        %s308 = ssub.s32 %s17, 2
        // Predicated region
        $region45: #{baseline_formula_forward.1} parent=43 // pred_check
          %p309 = pneg %p129
        $region46: #{baseline_formula_forward.1} parent=43 // pred_check_branch
          %311 = sbr.rel (%p309) target = $region48
        $region47: #{baseline_formula_forward.1} parent=43 // pred_region
          %s312 = sand.u32 %s114, 1
          %s313 = scalar_lea.sflag [#allocation4], %s312
          %s314 = sand.u32 %s114, 1
          %s315 = smul.addr %s314, 8
          %s316 = scalar_lea.vmem [#allocation7], %s315
          %317 = dma.done %s313, 128
        $region48: #{baseline_formula_forward.1} parent=43 // pred_fallthru
          _
      $region44: #{baseline_formula_forward.1} parent=5 // pred_fallthru
        _
    $region6: #{baseline_formula_forward.1} parent=1 // loop_footer
      %s21 = sadd.s32 1, %s17
    $region7: #{baseline_formula_forward.1} parent=1 // loop_footer_branch
      %16 = sbr.rel target = $region3
    $region8: #{baseline_formula_forward.1} parent=1 // loop_exit
      _
    %318 = vsyncpa [#allocation3], 1
    %s319 = scalar_lea.sflag [#allocation3], 1
    %320 = vsyncpa %s319, 1
    %321 = vsyncpa [#allocation6], 1
    %s322 = scalar_lea.sflag [#allocation6], 1
    %323 = vsyncpa %s322, 1
    %324 = vsyncpa [#allocation4], 1
    %s325 = scalar_lea.sflag [#allocation4], 1
    %326 = vsyncpa %s325, 1

</llo_original>
